<compile_context>
chip_gen: v5e
topology: v5e:2x2
jax: 0.10.0
libtpu: 0.0.40
codegen_flags: <defaults>
</compile_context>

<pallas_src>
import functools

import jax
import jax.numpy as jnp
from jax.experimental import pallas as pl
from jax.experimental.pallas import tpu as pltpu


def _round_up(x, m):
    return ((x + m - 1) // m) * m


def _vmem_limit_bytes():
    """~80% of physical VMEM (128 MiB on v5e/v6e, 64 MiB on v7x); safe fallback."""
    phys = 64 << 20
    try:
        cap = getattr(pltpu.get_tpu_info(), "vmem_capacity_bytes", None)
        if cap:
            phys = int(cap)
    except Exception:
        pass
    return int(phys * 0.8)


def _multi_cls_head_kernel(x_ref, w1_ref, b1_ref, w2_ref, b2_ref, o_ref, *,
                           n_chunks, chunk):
    """One batch tile: out = tanh(x @ w1 + b1) @ w2 + b2 (dropout = identity, eval)."""
    # TODO(synk): training-mode dropout (pltpu.prng_random_bits mask) not implemented.
    w1 = w1_ref[...]
    b1 = b1_ref[...]
    w2 = w2_ref[...]
    b2 = b2_ref[...]
    # Static chunking of the batch tile: chunk i+1's first matmul (MXU) overlaps
    # chunk i's tanh (EUP) under the LLO scheduler. Chunk starts are sublane-aligned.
    for c in range(n_chunks):
        rows = pl.ds(c * chunk, chunk)
        h = jnp.dot(x_ref[rows, :], w1, preferred_element_type=jnp.float32)
        h = jnp.tanh(h + b1)                                   # (chunk, n_inner) f32
        out = jnp.dot(h.astype(w2.dtype), w2, preferred_element_type=jnp.float32)
        o_ref[rows, :] = (out + b2).astype(o_ref.dtype)


def multi_cls_head(x, w1, b1, w2, b2, *, tb=None, compute_dtype=None):
    """x: [B, n_in]; w1: [n_in, n_inner]; b1: [n_inner];
       w2: [n_inner, n_out]; b2: [n_out]  ->  [B, n_out] in x.dtype.

    Weights are stored pre-transposed so the kernel runs row-major MXU matmuls.
    compute_dtype feeds the MXU (bf16 is valid on v5e, v6e and v7x); accumulation,
    tanh and bias adds stay float32. For repeated calls, pre-cast x/w1/w2 to the
    compute dtype at model init so the wrapper adds no per-call HBM passes.
    """
    B, n_in = x.shape
    n_inner = w1.shape[1]
    n_out = w2.shape[1]
    out_dtype = x.dtype
    cd = jnp.dtype(compute_dtype) if compute_dtype is not None else jnp.dtype(x.dtype)
    out_itemsize = jnp.dtype(out_dtype).itemsize

    # Sublane packing granularity for the batch (second-to-last) tile dim.
    sub = 8 if cd.itemsize >= 4 else (16 if cd.itemsize == 2 else 32)

    # Batch tile: never pad in HBM. A partial last block is handled by Pallas
    # (grid = cdiv(B, tb)); feature dims stay unpadded and use full-dim blocks.
    tb_cap = 1024 if (n_in <= 256 and n_out <= 256) else 512
    if tb is None:
        if B <= 128:
            tb = B                                     # single full-dim block
        else:
            # >= 2 grid steps so both v7x TensorCores get work.
            tb = min(tb_cap, _round_up(pl.cdiv(B, 2), sub))
    else:
        tb = min(int(tb), B)
        if tb < B:
            tb = max(sub, (tb // sub) * sub)

    num_blocks = pl.cdiv(B, tb)

    # In-kernel batch chunking (MXU/EUP overlap); only when chunks stay aligned.
    n_chunks = 1
    for c in (4, 2):
        if tb >= c * 64 and tb % (c * sub) == 0:
            n_chunks = c
            break
    chunk = tb // n_chunks

    # Cast only when dtypes differ (no-op / elided otherwise); biases are f32 2-D.
    x_c = x if x.dtype == cd else x.astype(cd)
    w1_c = w1 if w1.dtype == cd else w1.astype(cd)
    w2_c = w2 if w2.dtype == cd else w2.astype(cd)
    b1_c = b1.astype(jnp.float32).reshape(1, n_inner)
    b2_c = b2.astype(jnp.float32).reshape(1, n_out)

    cost = pl.CostEstimate(
        flops=2 * B * n_in * n_inner + 2 * B * n_inner * n_out,
        transcendentals=B * n_inner,
        bytes_accessed=((B * n_in + n_in * n_inner + n_inner * n_out) * cd.itemsize
                        + (n_inner + n_out) * 4
                        + B * n_out * out_itemsize),
    )

    kernel = functools.partial(_multi_cls_head_kernel, n_chunks=n_chunks, chunk=chunk)

    # TODO(synk): for very large n_in/n_inner/n_out the resident w1/w2 would not fit
    # v7x's 64 MiB VMEM; add K / n_out grid tiling (f32 acc scratch + pl.when
    # init/finalize) and pl.Buffered(1) on the resident operands at that point.
    out = pl.pallas_call(
        kernel,
        out_shape=jax.ShapeDtypeStruct((B, n_out), out_dtype),
        grid_spec=pltpu.PrefetchScalarGridSpec(
            num_scalar_prefetch=0,
            grid=(num_blocks,),
            in_specs=[
                pl.BlockSpec((tb, n_in), lambda i: (i, 0)),        # x tile
                pl.BlockSpec((n_in, n_inner), lambda i: (0, 0)),   # w1 (resident)
                pl.BlockSpec((1, n_inner), lambda i: (0, 0)),      # b1 (resident)
                pl.BlockSpec((n_inner, n_out), lambda i: (0, 0)),  # w2 (resident)
                pl.BlockSpec((1, n_out), lambda i: (0, 0)),        # b2 (resident)
            ],
            out_specs=pl.BlockSpec((tb, n_out), lambda i: (i, 0)),
        ),
        compiler_params=pltpu.CompilerParams(
            dimension_semantics=("parallel",),
            vmem_limit_bytes=_vmem_limit_bytes(),
        ),
        cost_estimate=cost,
    )(x_c, w1_c, b1_c, w2_c, b2_c)

    return out


def reference(x, w1, b1, w2, b2):
    h = jnp.tanh(x @ w1 + b1)
    return h @ w2 + b2


if __name__ == "__main__":
    # Small shapes consistent with the module: Linear(n_in, n_inner), Linear(n_inner, n_out)
    n_in, n_inner, n_out = 32, 64, 16
    key = jax.random.PRNGKey(0)
    kx, kw1, kb1, kw2, kb2 = jax.random.split(key, 5)

    w1 = jax.random.normal(kw1, (n_in, n_inner), dtype=jnp.float32) * 0.05
    b1 = jax.random.normal(kb1, (n_inner,), dtype=jnp.float32) * 0.01
    w2 = jax.random.normal(kw2, (n_inner, n_out), dtype=jnp.float32) * 0.05
    b2 = jax.random.normal(kb2, (n_out,), dtype=jnp.float32) * 0.01

    # Test 1: tiny batch, f32, single full-dim block, tight tolerance.
    x8 = jax.random.normal(kx, (8, n_in), dtype=jnp.float32)
    out = jax.block_until_ready(multi_cls_head(x8, w1, b1, w2, b2))
    ref = reference(x8, w1, b1, w2, b2)
    assert out.shape == (8, n_out)
    assert jnp.allclose(out, ref, atol=1e-5, rtol=1e-5), "f32 small-batch mismatch"

    # Test 2: batch not a multiple of the tile (partial last grid block, 2 steps), f32.
    x300 = jax.random.normal(kx, (300, n_in), dtype=jnp.float32)
    out2 = jax.block_until_ready(multi_cls_head(x300, w1, b1, w2, b2))
    ref2 = reference(x300, w1, b1, w2, b2)
    assert out2.shape == (300, n_out)
    assert jnp.allclose(out2, ref2, atol=1e-5, rtol=1e-5), "f32 partial-block mismatch"

    # Test 3: odd tiny batch (block == full dim, not a multiple of 8), f32.
    x5 = jax.random.normal(kx, (5, n_in), dtype=jnp.float32)
    out3 = jax.block_until_ready(multi_cls_head(x5, w1, b1, w2, b2))
    ref3 = reference(x5, w1, b1, w2, b2)
    assert out3.shape == (5, n_out)
    assert jnp.allclose(out3, ref3, atol=1e-5, rtol=1e-5), "f32 odd-batch mismatch"

    # Test 4: bf16 MXU compute path (v5e/v6e/v7x), exercises in-kernel chunking.
    out4 = jax.block_until_ready(
        multi_cls_head(x300, w1, b1, w2, b2, compute_dtype=jnp.bfloat16))
    assert out4.shape == (300, n_out)
    assert jnp.allclose(out4, ref2, atol=3e-2, rtol=5e-2), "bf16 mismatch"

    print("KERNEL_OK")
</pallas_src>

<mosaic_0001>
module attributes {stable_mosaic.version = 11 : i64} {
  func.func @_multi_cls_head_kernel(%arg0: i32, %arg1: memref<8x32xf32, #tpu.memory_space<vmem>>, %arg2: memref<32x64xf32, #tpu.memory_space<vmem>>, %arg3: memref<1x64xf32, #tpu.memory_space<vmem>>, %arg4: memref<64x16xf32, #tpu.memory_space<vmem>>, %arg5: memref<1x16xf32, #tpu.memory_space<vmem>>, %arg6: memref<8x16xf32, #tpu.memory_space<vmem>>) attributes {dimension_semantics = [#tpu.dimension_semantics<parallel>], iteration_bounds = array<i64: 1>, scalar_prefetch = 0 : i64, scratch_operands = 0 : i64, tpu.core_type = #tpu.core_type<tc>, window_params = [{transform_indices = @transform_0, window_bounds = array<i64: 8, 32>}, {pipeline_mode = #tpu.pipeline_mode<synchronous>, transform_indices = @transform_1, window_bounds = array<i64: 32, 64>}, {pipeline_mode = #tpu.pipeline_mode<synchronous>, transform_indices = @transform_2, window_bounds = array<i64: 1, 64>}, {pipeline_mode = #tpu.pipeline_mode<synchronous>, transform_indices = @transform_3, window_bounds = array<i64: 64, 16>}, {pipeline_mode = #tpu.pipeline_mode<synchronous>, transform_indices = @transform_4, window_bounds = array<i64: 1, 16>}, {transform_indices = @transform_5, window_bounds = array<i64: 8, 16>}]} {
    %c0 = arith.constant 0 : index
    %c0_0 = arith.constant 0 : index
    %0 = vector.load %arg2[%c0, %c0_0] : memref<32x64xf32, #tpu.memory_space<vmem>>, vector<32x64xf32>
    %c0_1 = arith.constant 0 : index
    %c0_2 = arith.constant 0 : index
    %1 = vector.load %arg3[%c0_1, %c0_2] : memref<1x64xf32, #tpu.memory_space<vmem>>, vector<1x64xf32>
    %c0_3 = arith.constant 0 : index
    %c0_4 = arith.constant 0 : index
    %2 = vector.load %arg4[%c0_3, %c0_4] : memref<64x16xf32, #tpu.memory_space<vmem>>, vector<64x16xf32>
    %c0_5 = arith.constant 0 : index
    %c0_6 = arith.constant 0 : index
    %3 = vector.load %arg5[%c0_5, %c0_6] : memref<1x16xf32, #tpu.memory_space<vmem>>, vector<1x16xf32>
    %c0_7 = arith.constant 0 : index
    %c0_8 = arith.constant 0 : index
    %4 = vector.load %arg1[%c0_7, %c0_8] : memref<8x32xf32, #tpu.memory_space<vmem>>, vector<8x32xf32>
    %cst = arith.constant dense<0.000000e+00> : vector<8x64xf32>
    %5 = tpu.matmul %4, %0, %cst {dimension_numbers = #tpu.dot_dimension_numbers<[1], [0], [0], [1], [0, 0, 1, 1], [], []>} : vector<8x32xf32>, vector<32x64xf32>, vector<8x64xf32> -> vector<8x64xf32>
    %6 = vector.broadcast %1 : vector<1x64xf32> to vector<8x64xf32>
    %7 = arith.addf %5, %6 : vector<8x64xf32>
    %8 = math.tanh %7 : vector<8x64xf32>
    %cst_9 = arith.constant dense<0.000000e+00> : vector<8x16xf32>
    %9 = tpu.matmul %8, %2, %cst_9 {dimension_numbers = #tpu.dot_dimension_numbers<[1], [0], [0], [1], [0, 0, 1, 1], [], []>} : vector<8x64xf32>, vector<64x16xf32>, vector<8x16xf32> -> vector<8x16xf32>
    %10 = vector.broadcast %3 : vector<1x16xf32> to vector<8x16xf32>
    %11 = arith.addf %9, %10 : vector<8x16xf32>
    %c0_10 = arith.constant 0 : index
    %c0_11 = arith.constant 0 : index
    %12 = vector.load %arg6[%c0_10, %c0_11] : memref<8x16xf32, #tpu.memory_space<vmem>>, vector<8x16xf32>
    tpu.vector_store %arg6[%c0_10, %c0_11], %11 {strides = array<i32>} : memref<8x16xf32, #tpu.memory_space<vmem>>, vector<8x16xf32>,
    return
  }
  func.func @transform_0(%arg0: i32) -> (i32, i32) {
    %c0_i32 = arith.constant 0 : i32
    %c0_i32_0 = arith.constant 0 : i32
    return %arg0, %c0_i32 : i32, i32
  }
  func.func @transform_1(%arg0: i32) -> (i32, i32) {
    %c0_i32 = arith.constant 0 : i32
    %c0_i32_0 = arith.constant 0 : i32
    %c0_i32_1 = arith.constant 0 : i32
    return %c0_i32, %c0_i32_0 : i32, i32
  }
  func.func @transform_2(%arg0: i32) -> (i32, i32) {
    %c0_i32 = arith.constant 0 : i32
    %c0_i32_0 = arith.constant 0 : i32
    %c0_i32_1 = arith.constant 0 : i32
    return %c0_i32, %c0_i32_0 : i32, i32
  }
  func.func @transform_3(%arg0: i32) -> (i32, i32) {
    %c0_i32 = arith.constant 0 : i32
    %c0_i32_0 = arith.constant 0 : i32
    %c0_i32_1 = arith.constant 0 : i32
    return %c0_i32, %c0_i32_0 : i32, i32
  }
  func.func @transform_4(%arg0: i32) -> (i32, i32) {
    %c0_i32 = arith.constant 0 : i32
    %c0_i32_0 = arith.constant 0 : i32
    %c0_i32_1 = arith.constant 0 : i32
    return %c0_i32, %c0_i32_0 : i32, i32
  }
  func.func @transform_5(%arg0: i32) -> (i32, i32) {
    %c0_i32 = arith.constant 0 : i32
    %c0_i32_0 = arith.constant 0 : i32
    return %arg0, %c0_i32 : i32, i32
  }
}

</mosaic_0001>

<llo_original>
// kernel: tpu_custom_call.1
$region0: #{tpu_custom_call.1}
  #allocation0 [shape = 'u32[]', space=smem, size = 0x4, offset = 0x4, fixed_abs, tag = 'smem constant byte address 0x4 - core index']
  #allocation1 [shape = 'u32[72,128]{1,0:T(1,128)}', space=vmem, size = 0x9000, scoped, tag = 'internal scratch']
  %s0 = inlined_call_operand.vmem [shape: f32[8,32], index: 0, kind: input, shape index: {}]
  %s1 = inlined_call_operand.vmem [shape: f32[32,64], index: 1, kind: input, shape index: {}]
  %s2 = inlined_call_operand.vmem [shape: f32[1,64], index: 2, kind: input, shape index: {}]
  %s3 = inlined_call_operand.vmem [shape: f32[64,16], index: 3, kind: input, shape index: {}]
  %s4 = inlined_call_operand.vmem [shape: f32[1,16], index: 4, kind: input, shape index: {}]
  %s5 = inlined_call_operand.hbm [shape: f32[8,16], index: 5, kind: output, shape index: {}]
  %s6 = sld [smem:[#allocation0]]
  $region30: #{tpu_custom_call.1} parent=0
    _
  %s8 = ssub.s32 1, %s6
  %s9 = scalar_select 0, %s8, %s6
  $region1: #{tpu_custom_call.1} parent=0
    #allocation2 [shape = 'u8[4096]{0}', space=vmem, size = 0x1000, scoped, tag = 'output window, operand 0, single buffered']
    #allocation3 [shape = 's32[1]{0}', space=sflag, size = 0x4, scoped, tag = 'scoped memory for tpu_custom_call.1']
    %10 = vsyncpa [#allocation3], 0
    // Predicated region
    $region2: #{tpu_custom_call.1} parent=1 // pred_check
      _
    $region3: #{tpu_custom_call.1} parent=1 // pred_check_branch
      %12 = sbr.rel (0) target = $region5
    $region4: #{tpu_custom_call.1} parent=1 // pred_region
      _
    $region5: #{tpu_custom_call.1} parent=1 // pred_fallthru
      _
    // Predicated region
    $region6: #{tpu_custom_call.1} parent=1 // pred_check
      _
    $region7: #{tpu_custom_call.1} parent=1 // pred_check_branch
      %14 = sbr.rel (0) target = $region9
    $region8: #{tpu_custom_call.1} parent=1 // pred_region
      _
    $region9: #{tpu_custom_call.1} parent=1 // pred_fallthru
      _
    // Predicated region
    $region10: #{tpu_custom_call.1} parent=1 // pred_check
      _
    $region11: #{tpu_custom_call.1} parent=1 // pred_check_branch
      %16 = sbr.rel (0) target = $region13
    $region12: #{tpu_custom_call.1} parent=1 // pred_region
      _
    $region13: #{tpu_custom_call.1} parent=1 // pred_fallthru
      _
    // Predicated region
    $region14: #{tpu_custom_call.1} parent=1 // pred_check
      _
    $region15: #{tpu_custom_call.1} parent=1 // pred_check_branch
      %18 = sbr.rel (0) target = $region17
    $region16: #{tpu_custom_call.1} parent=1 // pred_region
      _
    $region17: #{tpu_custom_call.1} parent=1 // pred_fallthru
      _
    // Predicated region
    $region18: #{tpu_custom_call.1} parent=1 // pred_check
      _
    $region19: #{tpu_custom_call.1} parent=1 // pred_check_branch
      %20 = sbr.rel (0) target = $region21
    $region20: #{tpu_custom_call.1} parent=1 // pred_region
      _
    $region21: #{tpu_custom_call.1} parent=1 // pred_fallthru
      _
    %v21 = vld [vmem:[%s1] sm:$0xff]
    %v22 = vld [vmem:[%s1 + $0x8] sm:$0xff]
    %v23 = vld [vmem:[%s1 + $0x10] sm:$0xff]
    %v24 = vld [vmem:[%s1 + $0x18] sm:$0xff]
    %v25 = vld [vmem:[%s2] sm:$0x1]
    %v26 = vld [vmem:[%s3] sm:$0xff]
    %v27 = vld [vmem:[%s3 + $0x8] sm:$0xff]
    %v28 = vld [vmem:[%s3 + $0x10] sm:$0xff]
    %v29 = vld [vmem:[%s3 + $0x18] sm:$0xff]
    %v30 = vld [vmem:[%s3 + $0x20] sm:$0xff]
    %v31 = vld [vmem:[%s3 + $0x28] sm:$0xff]
    %v32 = vld [vmem:[%s3 + $0x30] sm:$0xff]
    %v33 = vld [vmem:[%s3 + $0x38] sm:$0xff]
    %v34 = vld [vmem:[%s4] sm:$0x1]
    %v35 = vld [vmem:[%s0] sm:$0xff]
    %v37 = vperm.slane %v25, 0
    %vm39 = vcmask 261120
    %v41 = vsel %vm39, %v35, 0
    %43 = vmatpush.msra.mxu0 0.0
    %44 = vmatpush.msra.mxu0 0.0
    %45 = vmatpush.msra.mxu0 0.0
    %46 = vmatpush.msra.mxu0 0.0
    %47 = vmatpush.msra.mxu0 0.0
    %48 = vmatpush.msra.mxu0 0.0
    %49 = vmatpush.msra.mxu0 0.0
    %50 = vmatpush.msra.mxu0 0.0
    %51 = vmatpush.msra.mxu0 0.0
    %52 = vmatpush.msra.mxu0 0.0
    %53 = vmatpush.msra.mxu0 0.0
    %54 = vmatpush.msra.mxu0 0.0
    %55 = vmatpush.msra.mxu0 %v24
    %56 = vmatpush.msra.mxu0 %v23
    %57 = vmatpush.msra.mxu0 %v22
    %58 = vmatpush.msra.mxu0 %v21
    %59 = vmatmul.f32.gmra.mxu0 %v41
    %v60 = vpop.f32.mrf.mxu0
    %v61 = vadd.f32 %v37, %v60
    %62 = vdwg.mxu0
    %v63 = vtanh.pop %v61
    %v65 = vperm.slane %v34, 0
    %vm67 = vcmask 523264
    %v69 = vsel %vm67, %v63, 0
    %71 = vmatpush.msra.mxu0 0.0
    %72 = vmatpush.msra.mxu0 0.0
    %73 = vmatpush.msra.mxu0 0.0
    %74 = vmatpush.msra.mxu0 0.0
    %75 = vmatpush.msra.mxu0 0.0
    %76 = vmatpush.msra.mxu0 0.0
    %77 = vmatpush.msra.mxu0 0.0
    %78 = vmatpush.msra.mxu0 0.0
    %79 = vmatpush.msra.mxu0 %v33
    %80 = vmatpush.msra.mxu0 %v32
    %81 = vmatpush.msra.mxu0 %v31
    %82 = vmatpush.msra.mxu0 %v30
    %83 = vmatpush.msra.mxu0 %v29
    %84 = vmatpush.msra.mxu0 %v28
    %85 = vmatpush.msra.mxu0 %v27
    %86 = vmatpush.msra.mxu0 %v26
    %87 = vmatmul.f32.gmra.mxu0 %v69
    %v88 = vpop.f32.mrf.mxu0
    %v89 = vadd.f32 %v65, %v88
    %90 = vdwg.mxu0
    %vm91 = vcmask 130048
    %92 = vst.msk [vmem:[#allocation2] sm:$0xff] %vm91, %v89
    // Predicated region
    $region22: #{tpu_custom_call.1} parent=1 // pred_check
      _
    $region23: #{tpu_custom_call.1} parent=1 // pred_check_branch
      %94 = sbr.rel (0) target = $region25
    $region24: #{tpu_custom_call.1} parent=1 // pred_region
      %96 = vsyncadd [#allocation3], 0
      %s98 = sshll.u32 [#allocation2], 4
      %s99 = int_to_ptr.vmem [resolvable:$true] %s98
      %s100 = sshll.u32 %s5, 4
      %s101 = int_to_ptr.hbm [resolvable:$true] %s100
      %103 = dma.vmem_to_hbm [thread:$0]  %s99, 128, %s101, [#allocation3]
    $region25: #{tpu_custom_call.1} parent=1 // pred_fallthru
      _
    // Predicated region
    $region26: #{tpu_custom_call.1} parent=1 // pred_check
      _
    $region27: #{tpu_custom_call.1} parent=1 // pred_check_branch
      %105 = sbr.rel (0) target = $region29
    $region28: #{tpu_custom_call.1} parent=1 // pred_region
      %107 = dma.done [#allocation3], 128
    $region29: #{tpu_custom_call.1} parent=1 // pred_fallthru
      _
    %108 = vsyncpa [#allocation3], 1

</llo_original>
